<compile_context>
chip_gen: v6e
topology: v6e:2x2x1
jax: 0.10.0
libtpu: 0.0.40
codegen_flags: <defaults>
</compile_context>

<pallas_src>
import functools

import jax
import jax.numpy as jnp
from jax import lax
from jax.experimental import pallas as pl
from jax.experimental.pallas import tpu as pltpu

_LANES = 128
_TARGET_TILE_BYTES_F32 = 4 << 20   # per-input tile budget, f32 basis (past roofline knee)
_VMEM_LIMIT_BYTES = 40 << 20       # explicit scoped-VMEM limit: fits v7x 64 MiB physical


def _round_up(x, m):
    return (x + m - 1) // m * m


def _cdiv(a, b):
    return (a + b - 1) // b


def _mse_partial_kernel(x_ref, y_ref, o_ref, *, rows, tile_rows, k_acc, needs_mask):
    """Accumulates sum((x - y)^2) of the streamed rows into a (k_acc, 8, 128) f32 block."""
    i = pl.program_id(0)

    @pl.when(i == 0)
    def _init():
        o_ref[...] = jnp.zeros_like(o_ref)

    def _accum(mask_rows):
        d = x_ref[...].astype(jnp.float32) - y_ref[...].astype(jnp.float32)
        dsq = d * d
        if mask_rows:
            # Ragged last block: Pallas pads the block with unspecified data;
            # zero those rows.  row0 uses the real (unclamped) block index.
            row0 = i * tile_rows
            row_ids = row0 + lax.broadcasted_iota(jnp.int32, (tile_rows, _LANES), 0)
            dsq = jnp.where(row_ids < rows, dsq, 0.0)
        # Sublane-aligned vreg accumulation with k_acc independent chains:
        # (tile_rows,128) -> (chunks, k_acc, 8, 128) summed over the leading dim.
        dsq4 = dsq.reshape(tile_rows // (8 * k_acc), k_acc, 8, _LANES)
        o_ref[...] += jnp.sum(dsq4, axis=0)

    if needs_mask:
        last = pl.num_programs(0) - 1

        @pl.when(i != last)
        def _interior():
            _accum(False)

        @pl.when(i == last)
        def _ragged():
            _accum(True)
    else:
        _accum(False)


def hint_learning_loss(logits, targets):
    """MSE(logits, targets) with mean reduction (FitNets hint loss)."""
    assert logits.shape == targets.shape, "hint loss requires matching shapes"
    n_elems = logits.size

    x_flat = logits.reshape(-1)
    y_flat = targets.reshape(-1)

    rows = n_elems // _LANES
    n_bulk = rows * _LANES
    tail = n_elems - n_bulk

    total = jnp.zeros((), jnp.float32)

    if rows > 0:
        if tail:
            # Misaligned case: kernel runs only on the 128-aligned bulk (no pad copy).
            xb = lax.slice(x_flat, (0,), (n_bulk,))
            yb = lax.slice(y_flat, (0,), (n_bulk,))
        else:
            xb, yb = x_flat, y_flat
        xb = xb.reshape(rows, _LANES)
        yb = yb.reshape(rows, _LANES)

        # Row tile sized from the f32 working set (dtype-independent), multiple
        # of 16 rows so the block shape is valid for both f32 and packed bf16.
        max_tile_rows = max(16, (_TARGET_TILE_BYTES_F32 // (_LANES * 4)) // 16 * 16)
        tile_rows = min(_round_up(rows, 16), max_tile_rows)

        num_steps = _cdiv(rows, tile_rows)
        needs_mask = (num_steps * tile_rows) != rows

        # Number of independent accumulator chains (must divide tile_rows/8).
        k_acc = 8
        while tile_rows % (8 * k_acc):
            k_acc //= 2

        kernel = functools.partial(
            _mse_partial_kernel,
            rows=rows,
            tile_rows=tile_rows,
            k_acc=k_acc,
            needs_mask=needs_mask,
        )

        partials = pl.pallas_call(
            kernel,
            out_shape=jax.ShapeDtypeStruct((k_acc, 8, _LANES), jnp.float32),
            grid_spec=pltpu.PrefetchScalarGridSpec(
                num_scalar_prefetch=0,
                grid=(num_steps,),
                in_specs=[
                    pl.BlockSpec((tile_rows, _LANES), lambda i: (i, 0)),
                    pl.BlockSpec((tile_rows, _LANES), lambda i: (i, 0)),
                ],
                out_specs=pl.BlockSpec((k_acc, 8, _LANES), lambda i: (0, 0, 0)),
            ),
            compiler_params=pltpu.CompilerParams(
                dimension_semantics=("arbitrary",),
                vmem_limit_bytes=_VMEM_LIMIT_BYTES,
            ),
        )(xb, yb)

        total = total + jnp.sum(partials)

    if tail:
        # <128-element tail handled in plain XLA (tiny).
        xt = lax.slice(x_flat, (n_bulk,), (n_elems,)).astype(jnp.float32)
        yt = lax.slice(y_flat, (n_bulk,), (n_elems,)).astype(jnp.float32)
        total = total + jnp.sum((xt - yt) ** 2)

    return total / n_elems


if __name__ == "__main__":
    key = jax.random.PRNGKey(0)
    k1, k2 = jax.random.split(key)
    # Student / teacher intermediate feature maps (NCHW).
    student = jax.random.normal(k1, (2, 4, 16, 16), dtype=jnp.float32)
    teacher = jax.random.normal(k2, (2, 4, 16, 16), dtype=jnp.float32)

    loss = hint_learning_loss(student, teacher)
    loss = jax.block_until_ready(loss)

    # Sanity check against plain-JAX reference.
    ref = jnp.mean((student.astype(jnp.float32) - teacher.astype(jnp.float32)) ** 2)
    assert jnp.allclose(loss, ref, rtol=1e-5, atol=1e-6), (loss, ref)
    print("KERNEL_OK")
</pallas_src>

<mosaic_0001>
module attributes {stable_mosaic.version = 11 : i64} {
  func.func @_mse_partial_kernel(%arg0: i32, %arg1: memref<16x128xf32, #tpu.memory_space<vmem>>, %arg2: memref<16x128xf32, #tpu.memory_space<vmem>>, %arg3: memref<2x8x128xf32, #tpu.memory_space<vmem>>) attributes {dimension_semantics = [#tpu.dimension_semantics<arbitrary>], iteration_bounds = array<i64: 1>, scalar_prefetch = 0 : i64, scratch_operands = 0 : i64, tpu.core_type = #tpu.core_type<tc>, window_params = [{transform_indices = @transform_0, window_bounds = array<i64: 16, 128>}, {transform_indices = @transform_1, window_bounds = array<i64: 16, 128>}, {pipeline_mode = #tpu.pipeline_mode<synchronous>, transform_indices = @transform_2, window_bounds = array<i64: 2, 8, 128>}]} {
    %c0_i32 = arith.constant 0 : i32
    %0 = arith.cmpi eq, %arg0, %c0_i32 : i32
    %1 = arith.extui %0 : i1 to i32
    %c0_i32_0 = arith.constant 0 : i32
    %2 = arith.cmpi ne, %1, %c0_i32_0 : i32
    scf.if %2 {
      %cst_10 = arith.constant 0.000000e+00 : f32
      %12 = vector.broadcast %cst_10 : f32 to vector<2x8x128xf32>
      %c0_11 = arith.constant 0 : index
      %c0_12 = arith.constant 0 : index
      %c0_13 = arith.constant 0 : index
      %13 = vector.load %arg3[%c0_11, %c0_12, %c0_13] : memref<2x8x128xf32, #tpu.memory_space<vmem>>, vector<2x8x128xf32>
      tpu.vector_store %arg3[%c0_11, %c0_12, %c0_13], %12 {strides = array<i32>} : memref<2x8x128xf32, #tpu.memory_space<vmem>>, vector<2x8x128xf32>,
    } else {
    }
    %c0 = arith.constant 0 : index
    %c0_1 = arith.constant 0 : index
    %3 = vector.load %arg1[%c0, %c0_1] : memref<16x128xf32, #tpu.memory_space<vmem>>, vector<16x128xf32>
    %c0_2 = arith.constant 0 : index
    %c0_3 = arith.constant 0 : index
    %4 = vector.load %arg2[%c0_2, %c0_3] : memref<16x128xf32, #tpu.memory_space<vmem>>, vector<16x128xf32>
    %5 = arith.subf %3, %4 : vector<16x128xf32>
    %6 = arith.mulf %5, %5 : vector<16x128xf32>
    %7 = vector.shape_cast %6 : vector<16x128xf32> to vector<1x2x8x128xf32>
    %c0_4 = arith.constant 0 : index
    %c0_5 = arith.constant 0 : index
    %c0_6 = arith.constant 0 : index
    %8 = vector.load %arg3[%c0_4, %c0_5, %c0_6] : memref<2x8x128xf32, #tpu.memory_space<vmem>>, vector<2x8x128xf32>
    %cst = arith.constant dense<0.000000e+00> : vector<2x8x128xf32>
    %9 = vector.multi_reduction <add>, %7, %cst [0] : vector<1x2x8x128xf32> to vector<2x8x128xf32>
    %10 = arith.addf %8, %9 : vector<2x8x128xf32>
    %c0_7 = arith.constant 0 : index
    %c0_8 = arith.constant 0 : index
    %c0_9 = arith.constant 0 : index
    %11 = vector.load %arg3[%c0_7, %c0_8, %c0_9] : memref<2x8x128xf32, #tpu.memory_space<vmem>>, vector<2x8x128xf32>
    tpu.vector_store %arg3[%c0_7, %c0_8, %c0_9], %10 {strides = array<i32>} : memref<2x8x128xf32, #tpu.memory_space<vmem>>, vector<2x8x128xf32>,
    return
  }
  func.func @transform_0(%arg0: i32) -> (i32, i32) {
    %c0_i32 = arith.constant 0 : i32
    %c0_i32_0 = arith.constant 0 : i32
    return %arg0, %c0_i32 : i32, i32
  }
  func.func @transform_1(%arg0: i32) -> (i32, i32) {
    %c0_i32 = arith.constant 0 : i32
    %c0_i32_0 = arith.constant 0 : i32
    return %arg0, %c0_i32 : i32, i32
  }
  func.func @transform_2(%arg0: i32) -> (i32, i32, i32) {
    %c0_i32 = arith.constant 0 : i32
    %c0_i32_0 = arith.constant 0 : i32
    %c0_i32_1 = arith.constant 0 : i32
    %c0_i32_2 = arith.constant 0 : i32
    return %c0_i32, %c0_i32_0, %c0_i32_1 : i32, i32, i32
  }
}

</mosaic_0001>

<llo_original>
// kernel: tpu_custom_call.1
$region0: #{tpu_custom_call.1}
  #allocation0 [shape = 'u32[]', space=smem, size = 0x4, offset = 0x4, fixed_abs, tag = 'smem constant byte address 0x4 - core index']
  #allocation1 [shape = 'u32[144,128]{1,0:T(1,128)}', space=vmem, size = 0x12000, scoped, tag = 'internal scratch']
  %s0 = inlined_call_operand.hbm [shape: f32[16,128], index: 0, kind: input, shape index: {}]
  %s1 = inlined_call_operand.hbm [shape: f32[16,128], index: 1, kind: input, shape index: {}]
  %s2 = inlined_call_operand.hbm [shape: f32[2,8,128], index: 2, kind: output, shape index: {}]
  %s3 = sld [smem:[#allocation0]]
  $region30: #{tpu_custom_call.1} parent=0
    _
  %s5 = ssub.s32 1, %s3
  %s6 = scalar_select 0, %s5, %s3
  $region1: #{tpu_custom_call.1} parent=0
    #allocation2 [shape = 'u8[8192]{0}', space=vmem, size = 0x2000, scoped, tag = 'input window, operand 0, single buffered']
    #allocation3 [shape = 's32[1]{0}', space=sflag, size = 0x4, scoped, tag = 'scoped memory for tpu_custom_call.1']
    #allocation4 [shape = 's32[1]{0}', space=sflag, size = 0x4, scoped, tag = 'scoped memory for tpu_custom_call.1']
    #allocation5 [shape = 'u8[8192]{0}', space=vmem, size = 0x2000, scoped, tag = 'input window, operand 1, single buffered']
    #allocation6 [shape = 's32[1]{0}', space=sflag, size = 0x4, scoped, tag = 'scoped memory for tpu_custom_call.1']
    #allocation7 [shape = 'u8[8192]{0}', space=vmem, size = 0x2000, scoped, tag = 'output window, operand 0, single buffered']
    %7 = vsyncpa [#allocation3], 0
    %8 = vsyncpa [#allocation6], 0
    %9 = vsyncpa [#allocation4], 0
    // Predicated region
    $region2: #{tpu_custom_call.1} parent=1 // pred_check
      _
    $region3: #{tpu_custom_call.1} parent=1 // pred_check_branch
      %11 = sbr.rel (0) target = $region5
    $region4: #{tpu_custom_call.1} parent=1 // pred_region
      %s13 = ssub.s32 256, 256
      %14 = vsyncadd [#allocation3], %s13
      %s15 = sshll.u32 [#allocation2], 4
      %s16 = int_to_ptr.vmem [resolvable:$true] %s15
      %21 = dma.hbm_to_vmem [thread:$0]  %s0, 256, %s16, [#allocation3], 128, 128, 8
    $region5: #{tpu_custom_call.1} parent=1 // pred_fallthru
      _
    // Predicated region
    $region6: #{tpu_custom_call.1} parent=1 // pred_check
      _
    $region7: #{tpu_custom_call.1} parent=1 // pred_check_branch
      %23 = sbr.rel (0) target = $region9
    $region8: #{tpu_custom_call.1} parent=1 // pred_region
      %s25 = ssub.s32 256, 256
      %26 = vsyncadd [#allocation6], %s25
      %s27 = sshll.u32 [#allocation5], 4
      %s28 = int_to_ptr.vmem [resolvable:$true] %s27
      %33 = dma.hbm_to_vmem [thread:$0]  %s1, 256, %s28, [#allocation6], 128, 128, 8
    $region9: #{tpu_custom_call.1} parent=1 // pred_fallthru
      _
    // Predicated region
    $region10: #{tpu_custom_call.1} parent=1 // pred_check
      _
    $region11: #{tpu_custom_call.1} parent=1 // pred_check_branch
      %35 = sbr.rel (0) target = $region13
    $region12: #{tpu_custom_call.1} parent=1 // pred_region
      %36 = dma.done [#allocation3], 256
    $region13: #{tpu_custom_call.1} parent=1 // pred_fallthru
      _
    // Predicated region
    $region14: #{tpu_custom_call.1} parent=1 // pred_check
      _
    $region15: #{tpu_custom_call.1} parent=1 // pred_check_branch
      %38 = sbr.rel (0) target = $region17
    $region16: #{tpu_custom_call.1} parent=1 // pred_region
      %39 = dma.done [#allocation6], 256
    $region17: #{tpu_custom_call.1} parent=1 // pred_fallthru
      _
    %p40 = scmp.eq.s32.totalorder 0, 0
    // Predicated region
    $region18: #{tpu_custom_call.1} parent=1 // pred_check
      %p41 = pneg %p40
    $region19: #{tpu_custom_call.1} parent=1 // pred_check_branch
      %43 = sbr.rel (%p41) target = $region21
    $region20: #{tpu_custom_call.1} parent=1 // pred_region
      %44 = vst [vmem:[#allocation7] sm:$0xff] 0.0
      %45 = vst [vmem:[#allocation7 + $0x8] sm:$0xff] 0.0
    $region21: #{tpu_custom_call.1} parent=1 // pred_fallthru
      _
    %v46 = vld [vmem:[#allocation2] sm:$0xff]
    %v47 = vld [vmem:[#allocation2 + $0x8] sm:$0xff]
    %v48 = vld [vmem:[#allocation5] sm:$0xff]
    %v49 = vld [vmem:[#allocation5 + $0x8] sm:$0xff]
    %v50 = vsub.f32 %v46, %v48
    %v51 = vsub.f32 %v47, %v49
    %v52 = vmul.f32 %v50, %v50
    %v53 = vmul.f32 %v51, %v51
    %v54 = vld [vmem:[#allocation7] sm:$0xff]
    %v55 = vld [vmem:[#allocation7 + $0x8] sm:$0xff]
    %v56 = vadd.f32 %v52, 0.0
    %v57 = vadd.f32 %v53, 0.0
    %v58 = vadd.f32 %v54, %v56
    %v59 = vadd.f32 %v55, %v57
    %60 = vst [vmem:[#allocation7] sm:$0xff] %v58
    %61 = vst [vmem:[#allocation7 + $0x8] sm:$0xff] %v59
    // Predicated region
    $region22: #{tpu_custom_call.1} parent=1 // pred_check
      _
    $region23: #{tpu_custom_call.1} parent=1 // pred_check_branch
      %63 = sbr.rel (0) target = $region25
    $region24: #{tpu_custom_call.1} parent=1 // pred_region
      %s65 = ssub.s32 256, 256
      %66 = vsyncadd [#allocation4], %s65
      %s67 = sshll.u32 [#allocation7], 4
      %s68 = int_to_ptr.vmem [resolvable:$true] %s67
      %73 = dma.vmem_to_hbm [thread:$0]  %s68, 256, %s2, [#allocation4], 128, 128, 8
    $region25: #{tpu_custom_call.1} parent=1 // pred_fallthru
      _
    // Predicated region
    $region26: #{tpu_custom_call.1} parent=1 // pred_check
      _
    $region27: #{tpu_custom_call.1} parent=1 // pred_check_branch
      %75 = sbr.rel (0) target = $region29
    $region28: #{tpu_custom_call.1} parent=1 // pred_region
      %76 = dma.done [#allocation4], 256
    $region29: #{tpu_custom_call.1} parent=1 // pred_fallthru
      _
    %77 = vsyncpa [#allocation3], 1
    %78 = vsyncpa [#allocation6], 1
    %79 = vsyncpa [#allocation4], 1

</llo_original>
